<compile_context>
chip_gen: v7x
topology: tpu7x:2x2x1
jax: 0.10.0
libtpu: 0.0.40
codegen_flags: <defaults>
</compile_context>

<pallas_src>
import jax
import jax.numpy as jnp
from jax.experimental import pallas as pl
from jax.experimental.pallas import tpu as pltpu

LN_EPS = 1e-5  # torch.nn.LayerNorm default eps


def posenc_ln_kernel(x_ref, pos_ref, gamma_ref, beta_ref, o_ref):
    # x_ref, pos_ref, o_ref: (TL, H); gamma_ref, beta_ref: (1, H)
    h = x_ref[...].astype(jnp.float32) + pos_ref[...].astype(jnp.float32)
    inv_h = jnp.float32(1.0 / h.shape[-1])
    # Single-sweep statistics: sum and sum-of-squares together.
    mean = jnp.sum(h, axis=-1, keepdims=True) * inv_h
    mean_sq = jnp.sum(h * h, axis=-1, keepdims=True) * inv_h
    var = jnp.maximum(mean_sq - mean * mean, 0.0)  # clamp tiny negative rounding
    inv_std = jax.lax.rsqrt(var + LN_EPS)
    out = (h - mean) * inv_std * gamma_ref[...].astype(jnp.float32) \
        + beta_ref[...].astype(jnp.float32)
    o_ref[...] = out.astype(o_ref.dtype)


def _choose_row_tile(L, H, itemsize, target_bytes=4 * 1024 * 1024):
    """Pick (TL, L_pad): row tile (multiple of 8, ~target_bytes) and padded L.

    Prefers a divisor of L (no padding).  If L has no reasonably large
    divisor that is a multiple of 8 (e.g. L % 8 != 0 or L = 8 * prime), pads
    L up to a multiple of the desired tile instead of shrinking the tile.
    """
    row_bytes = max(1, H * itemsize)
    max_rows = max(8, (target_bytes // row_bytes) // 8 * 8)
    L8 = ((L + 7) // 8) * 8
    desired = min(max_rows, L8)

    # 1) Desired tile divides L exactly: no padding needed.
    if L % desired == 0:
        return desired, L
    # 2) Look for the largest divisor of L that is a multiple of 8.
    if L % 8 == 0:
        best = 8
        t = 8
        limit = min(L, max_rows)
        while t <= limit:
            if L % t == 0:
                best = t
            t += 8
        if best == L or best >= max(64, desired // 4):
            return best, L
    # 3) Otherwise pad the sequence up to a multiple of the desired tile.
    L_pad = ((L + desired - 1) // desired) * desired
    return desired, L_pad


def trainable_positional_encoding(input_feat, pos_table, gamma, beta):
    """input_feat: (B, L, H); pos_table: (max_pos, H); gamma/beta: (H,)."""
    B, L, H = input_feat.shape
    dtype = input_feat.dtype
    itemsize = jnp.dtype(dtype).itemsize

    gamma2 = gamma.reshape(1, H)
    beta2 = beta.reshape(1, H)

    TL, L_pad = _choose_row_tile(L, H, itemsize)
    n_l = L_pad // TL

    x = input_feat
    pos = pos_table
    if L_pad != L:
        # Pad rows so every row tile stays within one sequence; padded rows
        # produce finite garbage (var + eps > 0) and are sliced off below.
        x = jnp.pad(input_feat, ((0, 0), (0, L_pad - L), (0, 0)))
    if pos.shape[0] < L_pad:
        pos = jnp.pad(pos, ((0, L_pad - pos.shape[0]), (0, 0)))
    x2 = x.reshape(B * L_pad, H)

    out = pl.pallas_call(
        posenc_ln_kernel,
        out_shape=jax.ShapeDtypeStruct((B * L_pad, H), dtype),
        grid_spec=pltpu.PrefetchScalarGridSpec(
            num_scalar_prefetch=0,
            # Outer axis = position tile, inner (fast) axis = batch: the pos
            # block index is constant across the inner axis, so its DMA is
            # skipped on revisits -> pos read once instead of B times.
            grid=(n_l, B),
            in_specs=[
                pl.BlockSpec((TL, H), lambda i, b: (b * n_l + i, 0)),
                pl.BlockSpec((TL, H), lambda i, b: (i, 0)),   # windows full table
                pl.BlockSpec((1, H), lambda i, b: (0, 0)),
                pl.BlockSpec((1, H), lambda i, b: (0, 0)),
            ],
            out_specs=pl.BlockSpec((TL, H), lambda i, b: (b * n_l + i, 0)),
        ),
        compiler_params=pltpu.CompilerParams(
            dimension_semantics=("parallel", "parallel"),
            vmem_limit_bytes=48 * 1024 * 1024,
        ),
    )(x2, pos, gamma2, beta2)

    out = out.reshape(B, L_pad, H)
    if L_pad != L:
        out = out[:, :L, :]
    return out


def reference(input_feat, pos_table, gamma, beta):
    B, L, H = input_feat.shape
    h = input_feat.astype(jnp.float32) + pos_table[:L][None].astype(jnp.float32)
    mean = jnp.mean(h, axis=-1, keepdims=True)
    var = jnp.mean((h - mean) ** 2, axis=-1, keepdims=True)
    out = (h - mean) / jnp.sqrt(var + LN_EPS) * gamma.astype(jnp.float32) \
        + beta.astype(jnp.float32)
    return out.astype(input_feat.dtype)


if __name__ == "__main__":
    B, L, H = 2, 8, 32
    MAX_POS = 16

    key = jax.random.PRNGKey(0)
    k_x, k_emb, k_g, k_b, k_x2 = jax.random.split(key, 5)

    x = jax.random.normal(k_x, (B, L, H), dtype=jnp.float32)
    # nn.Embedding default init: N(0, 1)
    pos_table = jax.random.normal(k_emb, (MAX_POS, H), dtype=jnp.float32)
    # nn.LayerNorm init is weight=1 / bias=0; perturb so the affine path is tested.
    gamma = 1.0 + 0.1 * jax.random.normal(k_g, (H,), dtype=jnp.float32)
    beta = 0.1 * jax.random.normal(k_b, (H,), dtype=jnp.float32)

    out = jax.block_until_ready(
        trainable_positional_encoding(x, pos_table, gamma, beta))
    ref = reference(x, pos_table, gamma, beta)
    assert out.shape == (B, L, H)
    assert jnp.allclose(out, ref, atol=1e-4, rtol=1e-4), "mismatch on main path"

    # Awkward-L path (L % 8 != 0 -> wrapper-side row padding, same tiled kernel).
    L2 = 12
    x2 = jax.random.normal(k_x2, (B, L2, H), dtype=jnp.float32)
    out2 = jax.block_until_ready(
        trainable_positional_encoding(x2, pos_table, gamma, beta))
    ref2 = reference(x2, pos_table, gamma, beta)
    assert out2.shape == (B, L2, H)
    assert jnp.allclose(out2, ref2, atol=1e-4, rtol=1e-4), "mismatch on padded path"

    print("KERNEL_OK")
</pallas_src>

<mosaic_0001>
module attributes {stable_mosaic.version = 11 : i64} {
  func.func @posenc_ln_kernel(%arg0: i32, %arg1: i32, %arg2: memref<8x32xf32, #tpu.memory_space<vmem>>, %arg3: memref<8x32xf32, #tpu.memory_space<vmem>>, %arg4: memref<1x32xf32, #tpu.memory_space<vmem>>, %arg5: memref<1x32xf32, #tpu.memory_space<vmem>>, %arg6: memref<8x32xf32, #tpu.memory_space<vmem>>) attributes {dimension_semantics = [#tpu.dimension_semantics<parallel>, #tpu.dimension_semantics<parallel>], iteration_bounds = array<i64: 1, 2>, scalar_prefetch = 0 : i64, scratch_operands = 0 : i64, tpu.core_type = #tpu.core_type<tc>, window_params = [{transform_indices = @transform_0, window_bounds = array<i64: 8, 32>}, {transform_indices = @transform_1, window_bounds = array<i64: 8, 32>}, {pipeline_mode = #tpu.pipeline_mode<synchronous>, transform_indices = @transform_2, window_bounds = array<i64: 1, 32>}, {pipeline_mode = #tpu.pipeline_mode<synchronous>, transform_indices = @transform_3, window_bounds = array<i64: 1, 32>}, {transform_indices = @transform_4, window_bounds = array<i64: 8, 32>}]} {
    %c0 = arith.constant 0 : index
    %c0_0 = arith.constant 0 : index
    %0 = vector.load %arg2[%c0, %c0_0] : memref<8x32xf32, #tpu.memory_space<vmem>>, vector<8x32xf32>
    %c0_1 = arith.constant 0 : index
    %c0_2 = arith.constant 0 : index
    %1 = vector.load %arg3[%c0_1, %c0_2] : memref<8x32xf32, #tpu.memory_space<vmem>>, vector<8x32xf32>
    %2 = arith.addf %0, %1 : vector<8x32xf32>
    %cst = arith.constant dense<0.000000e+00> : vector<8xf32>
    %3 = vector.multi_reduction <add>, %2, %cst [1] : vector<8x32xf32> to vector<8xf32>
    %4 = vector.shape_cast %3 : vector<8xf32> to vector<8x1xf32>
    %cst_3 = arith.constant 3.125000e-02 : f32
    %5 = vector.broadcast %cst_3 : f32 to vector<8x1xf32>
    %6 = arith.mulf %4, %5 : vector<8x1xf32>
    %7 = arith.mulf %2, %2 : vector<8x32xf32>
    %cst_4 = arith.constant dense<0.000000e+00> : vector<8xf32>
    %8 = vector.multi_reduction <add>, %7, %cst_4 [1] : vector<8x32xf32> to vector<8xf32>
    %9 = vector.shape_cast %8 : vector<8xf32> to vector<8x1xf32>
    %cst_5 = arith.constant 3.125000e-02 : f32
    %10 = vector.broadcast %cst_5 : f32 to vector<8x1xf32>
    %11 = arith.mulf %9, %10 : vector<8x1xf32>
    %12 = arith.mulf %6, %6 : vector<8x1xf32>
    %13 = arith.subf %11, %12 : vector<8x1xf32>
    %cst_6 = arith.constant 0.000000e+00 : f32
    %14 = vector.broadcast %cst_6 : f32 to vector<8x1xf32>
    %15 = arith.maximumf %13, %14 : vector<8x1xf32>
    %cst_7 = arith.constant 9.99999974E-6 : f32
    %16 = vector.broadcast %cst_7 : f32 to vector<8x1xf32>
    %17 = arith.addf %15, %16 : vector<8x1xf32>
    %18 = math.rsqrt %17 : vector<8x1xf32>
    %19 = vector.broadcast %6 : vector<8x1xf32> to vector<8x32xf32>
    %20 = arith.subf %2, %19 : vector<8x32xf32>
    %21 = vector.broadcast %18 : vector<8x1xf32> to vector<8x32xf32>
    %22 = arith.mulf %20, %21 : vector<8x32xf32>
    %c0_8 = arith.constant 0 : index
    %c0_9 = arith.constant 0 : index
    %23 = vector.load %arg4[%c0_8, %c0_9] : memref<1x32xf32, #tpu.memory_space<vmem>>, vector<1x32xf32>
    %24 = vector.broadcast %23 : vector<1x32xf32> to vector<8x32xf32>
    %25 = arith.mulf %22, %24 : vector<8x32xf32>
    %c0_10 = arith.constant 0 : index
    %c0_11 = arith.constant 0 : index
    %26 = vector.load %arg5[%c0_10, %c0_11] : memref<1x32xf32, #tpu.memory_space<vmem>>, vector<1x32xf32>
    %27 = vector.broadcast %26 : vector<1x32xf32> to vector<8x32xf32>
    %28 = arith.addf %25, %27 : vector<8x32xf32>
    %c0_12 = arith.constant 0 : index
    %c0_13 = arith.constant 0 : index
    %29 = vector.load %arg6[%c0_12, %c0_13] : memref<8x32xf32, #tpu.memory_space<vmem>>, vector<8x32xf32>
    tpu.vector_store %arg6[%c0_12, %c0_13], %28 {strides = array<i32>} : memref<8x32xf32, #tpu.memory_space<vmem>>, vector<8x32xf32>,
    return
  }
  func.func @transform_0(%arg0: i32, %arg1: i32) -> (i32, i32) {
    %c1_i32 = arith.constant 1 : i32
    %0 = arith.muli %arg1, %c1_i32 : i32
    %1 = arith.addi %0, %arg0 : i32
    %c0_i32 = arith.constant 0 : i32
    %c0_i32_0 = arith.constant 0 : i32
    return %1, %c0_i32 : i32, i32
  }
  func.func @transform_1(%arg0: i32, %arg1: i32) -> (i32, i32) {
    %c0_i32 = arith.constant 0 : i32
    %c0_i32_0 = arith.constant 0 : i32
    return %arg0, %c0_i32 : i32, i32
  }
  func.func @transform_2(%arg0: i32, %arg1: i32) -> (i32, i32) {
    %c0_i32 = arith.constant 0 : i32
    %c0_i32_0 = arith.constant 0 : i32
    %c0_i32_1 = arith.constant 0 : i32
    return %c0_i32, %c0_i32_0 : i32, i32
  }
  func.func @transform_3(%arg0: i32, %arg1: i32) -> (i32, i32) {
    %c0_i32 = arith.constant 0 : i32
    %c0_i32_0 = arith.constant 0 : i32
    %c0_i32_1 = arith.constant 0 : i32
    return %c0_i32, %c0_i32_0 : i32, i32
  }
  func.func @transform_4(%arg0: i32, %arg1: i32) -> (i32, i32) {
    %c1_i32 = arith.constant 1 : i32
    %0 = arith.muli %arg1, %c1_i32 : i32
    %1 = arith.addi %0, %arg0 : i32
    %c0_i32 = arith.constant 0 : i32
    %c0_i32_0 = arith.constant 0 : i32
    return %1, %c0_i32 : i32, i32
  }
}

</mosaic_0001>

<llo_original>
// kernel: tpu_custom_call.1
$region0: #{tpu_custom_call.1}
  #allocation0 [shape = 'u32[]', space=smem, size = 0x4, offset = 0x4, fixed_abs, tag = 'smem constant byte address 0x4 - core index']
  #allocation1 [shape = 'u32[144,128]{1,0:T(1,128)}', space=vmem, size = 0x12000, scoped, tag = 'internal scratch']
  %s0 = inlined_call_operand.hbm [shape: f32[16,32], index: 0, kind: input, shape index: {}]
  %s1 = inlined_call_operand.hbm [shape: f32[16,32], index: 1, kind: input, shape index: {}]
  %s2 = inlined_call_operand.vmem [shape: f32[1,32], index: 2, kind: input, shape index: {}]
  %s3 = inlined_call_operand.vmem [shape: f32[1,32], index: 3, kind: input, shape index: {}]
  %s4 = inlined_call_operand.hbm [shape: f32[16,32], index: 4, kind: output, shape index: {}]
  %s5 = sld [smem:[#allocation0]]
  $region57: #{tpu_custom_call.1} parent=0
    _
  %s7 = ssub.s32 1, %s5
  %s8 = scalar_select 0, %s7, %s5
  $region1: #{tpu_custom_call.1} parent=0
    #allocation2 [shape = 'u8[8192]{0}', space=vmem, size = 0x2000, scoped, tag = 'input window, operand 0']
    #allocation3 [shape = 's32[2]{0}', space=sflag, size = 0x8, scoped, tag = 'scoped memory for tpu_custom_call.1']
    #allocation4 [shape = 's32[2]{0}', space=sflag, size = 0x8, scoped, tag = 'scoped memory for tpu_custom_call.1']
    #allocation5 [shape = 'u8[4096]{0}', space=vmem, size = 0x1000, scoped, tag = 'input window, operand 1, single buffered']
    #allocation6 [shape = 's32[1]{0}', space=sflag, size = 0x4, scoped, tag = 'scoped memory for tpu_custom_call.1']
    #allocation7 [shape = 'u8[8192]{0}', space=vmem, size = 0x2000, scoped, tag = 'output window, operand 0']
    %9 = vsyncpa [#allocation3], 0
    %s10 = scalar_lea.sflag [#allocation3], 1
    %11 = vsyncpa %s10, 0
    %12 = vsyncpa [#allocation6], 0
    %13 = vsyncpa [#allocation4], 0
    %s14 = scalar_lea.sflag [#allocation4], 1
    %15 = vsyncpa %s14, 0
    loop: start=0, step=1, limit=4
    $region2: #{tpu_custom_call.1} parent=1 // loop_pre_header
      _
    $region3: #{tpu_custom_call.1} parent=1 // loop_header
      %s17 = sphi 0, %s21
      %p18 = scmp.ge.s32.totalorder %s17, 4
      %s24 = sphi 0, %s36
      %s25 = sphi 0, %s32
      %s26 = sphi 0, %s24
      %s27 = sphi 0, %s25
      %s28 = sphi 0, %s26
      %s29 = sphi 0, %s27
      %s41 = sphi 0, %s43
      %s44 = sphi 0, %s41
      %s45 = sphi 0, %s44
      %s61 = sphi 0, %s45
      %s67 = sphi 0, %s69
      %s70 = sphi 0, %s67
      %s71 = sphi 0, %s70
      %s87 = sphi 0, %s71
      %s91 = sphi 0, %s91
      %s93 = sphi 0, %s91
      %s94 = sphi 0, %s93
      %s108 = sphi 0, %s94
      %s112 = sphi 0, %s112
      %s114 = sphi 0, %s112
      %s115 = sphi 0, %s114
      %s129 = sphi 0, %s115
      %s137 = sphi 0, %s139
      %s140 = sphi 0, %s137
      %s141 = sphi 0, %s140
      %s157 = sphi 0, %s141
    $region4: #{tpu_custom_call.1} parent=1 // loop_header_branch
      %20 = sbr.rel (%p18) target = $region8
    $region5: #{tpu_custom_call.1} parent=1 // loop_body
      %s22 = ssub.s32 %s17, 1
      %s23 = ssub.s32 %s17, 2
      %s30 = sadd.s32 1, %s25
      %p31 = scmp.ge.s32.totalorder %s30, 2
      %s32 = scalar_select %p31, 0, %s30
      %s33 = sadd.s32 1, %s24
      %s34 = scalar_select %p31, %s33, %s24
      %p35 = scmp.ge.s32.totalorder %s34, 1
      %s36 = scalar_select %p35, 0, %s34
      %s37 = sadd.s32 %s25, %s24
      %s38 = sadd.s32 %s32, %s36
      %s39 = ssub.s32 %s37, %s38
      %p40 = scmp.eq.s32.totalorder %s39, 0
      %s42 = sadd.s32 %s41, 1
      %s43 = scalar_select %p40, %s41, %s42
      %p46 = pneg %p40
      %p47 = scmp.eq.s32.totalorder %s17, 1
      %p48 = por %p46, %p47
      %p49 = scmp.ne.s32.totalorder %s41, %s44
      %p50 = scmp.eq.s32.totalorder %s17, 0
      %p51 = por %p49, %p50
      %p52 = scmp.ne.s32.totalorder %s41, %s44
      %p53 = scmp.eq.s32.totalorder %s22, 1
      %p54 = por %p52, %p53
      %p55 = scmp.ne.s32.totalorder %s44, %s45
      %p56 = scmp.eq.s32.totalorder %s22, 0
      %p57 = por %p55, %p56
      %p58 = scmp.ne.s32.totalorder %s44, %s45
      %p59 = scmp.eq.s32.totalorder %s23, 1
      %p60 = por %p58, %p59
      %p62 = scmp.ne.s32.totalorder %s45, %s61
      %p63 = scmp.eq.s32.totalorder %s23, 0
      %p64 = por %p62, %p63
      %s65 = ssub.s32 %s24, %s36
      %p66 = scmp.eq.s32.totalorder %s65, 0
      %s68 = sadd.s32 %s67, 1
      %s69 = scalar_select %p66, %s67, %s68
      %p72 = pneg %p66
      %p73 = scmp.eq.s32.totalorder %s17, 1
      %p74 = por %p72, %p73
      %p75 = scmp.ne.s32.totalorder %s67, %s70
      %p76 = scmp.eq.s32.totalorder %s17, 0
      %p77 = por %p75, %p76
      %p78 = scmp.ne.s32.totalorder %s67, %s70
      %p79 = scmp.eq.s32.totalorder %s22, 1
      %p80 = por %p78, %p79
      %p81 = scmp.ne.s32.totalorder %s70, %s71
      %p82 = scmp.eq.s32.totalorder %s22, 0
      %p83 = por %p81, %p82
      %p84 = scmp.ne.s32.totalorder %s70, %s71
      %p85 = scmp.eq.s32.totalorder %s23, 1
      %p86 = por %p84, %p85
      %p88 = scmp.ne.s32.totalorder %s71, %s87
      %p89 = scmp.eq.s32.totalorder %s23, 0
      %p90 = por %p88, %p89
      %s92 = sadd.s32 %s91, 1
      %p95 = scmp.eq.s32.totalorder %s17, 1
      %p96 = scmp.ne.s32.totalorder %s91, %s93
      %p97 = scmp.eq.s32.totalorder %s17, 0
      %p98 = por %p96, %p97
      %p99 = scmp.ne.s32.totalorder %s91, %s93
      %p100 = scmp.eq.s32.totalorder %s22, 1
      %p101 = por %p99, %p100
      %p102 = scmp.ne.s32.totalorder %s93, %s94
      %p103 = scmp.eq.s32.totalorder %s22, 0
      %p104 = por %p102, %p103
      %p105 = scmp.ne.s32.totalorder %s93, %s94
      %p106 = scmp.eq.s32.totalorder %s23, 1
      %p107 = por %p105, %p106
      %p109 = scmp.ne.s32.totalorder %s94, %s108
      %p110 = scmp.eq.s32.totalorder %s23, 0
      %p111 = por %p109, %p110
      %s113 = sadd.s32 %s112, 1
      %p116 = scmp.eq.s32.totalorder %s17, 1
      %p117 = scmp.ne.s32.totalorder %s112, %s114
      %p118 = scmp.eq.s32.totalorder %s17, 0
      %p119 = por %p117, %p118
      %p120 = scmp.ne.s32.totalorder %s112, %s114
      %p121 = scmp.eq.s32.totalorder %s22, 1
      %p122 = por %p120, %p121
      %p123 = scmp.ne.s32.totalorder %s114, %s115
      %p124 = scmp.eq.s32.totalorder %s22, 0
      %p125 = por %p123, %p124
      %p126 = scmp.ne.s32.totalorder %s114, %s115
      %p127 = scmp.eq.s32.totalorder %s23, 1
      %p128 = por %p126, %p127
      %p130 = scmp.ne.s32.totalorder %s115, %s129
      %p131 = scmp.eq.s32.totalorder %s23, 0
      %p132 = por %p130, %p131
      %s133 = sadd.s32 %s25, %s24
      %s134 = sadd.s32 %s32, %s36
      %s135 = ssub.s32 %s133, %s134
      %p136 = scmp.eq.s32.totalorder %s135, 0
      %s138 = sadd.s32 %s137, 1
      %s139 = scalar_select %p136, %s137, %s138
      %p142 = pneg %p136
      %p143 = scmp.eq.s32.totalorder %s17, 1
      %p144 = por %p142, %p143
      %p145 = scmp.ne.s32.totalorder %s137, %s140
      %p146 = scmp.eq.s32.totalorder %s17, 0
      %p147 = por %p145, %p146
      %p148 = scmp.ne.s32.totalorder %s137, %s140
      %p149 = scmp.eq.s32.totalorder %s22, 1
      %p150 = por %p148, %p149
      %p151 = scmp.ne.s32.totalorder %s140, %s141
      %p152 = scmp.eq.s32.totalorder %s22, 0
      %p153 = por %p151, %p152
      %p154 = scmp.ne.s32.totalorder %s140, %s141
      %p155 = scmp.eq.s32.totalorder %s23, 1
      %p156 = por %p154, %p155
      %p158 = scmp.ne.s32.totalorder %s141, %s157
      %p159 = scmp.eq.s32.totalorder %s23, 0
      %p160 = por %p158, %p159
      %p161 = scmp.le.s32.totalorder 1, %s17
      %p162 = scmp.lt.s32.totalorder %s17, 3
      %p163 = pnand %p161, %p162
      %p164 = pneg %p163
      // Predicated region
      $region9: #{tpu_custom_call.1} parent=5 // pred_check
        _
      $region10: #{tpu_custom_call.1} parent=5 // pred_check_branch
        %166 = sbr.rel (%p163) target = $region12
      $region11: #{tpu_custom_call.1} parent=5 // pred_region
        %s167 = ssub.s32 %s17, 1
        // Predicated region
        $region13: #{tpu_custom_call.1} parent=11 // pred_check
          %p168 = pneg %p83
        $region14: #{tpu_custom_call.1} parent=11 // pred_check_branch
          %170 = sbr.rel (%p168) target = $region16
        $region15: #{tpu_custom_call.1} parent=11 // pred_region
          %s172 = ssub.s32 128, 128
          %173 = vsyncadd [#allocation6], %s172
          %s174 = smul.addr %s26, 128
          %s175 = scalar_lea.hbm %s1, %s174
          %s177 = sshll.u32 [#allocation5], 4
          %s178 = int_to_ptr.vmem [resolvable:$true] %s177
          %180 = dma.hbm_to_vmem [thread:$0]  %s175, 128, %s178, [#allocation6]
        $region16: #{tpu_custom_call.1} parent=11 // pred_fallthru
          _
        // Predicated region
        $region17: #{tpu_custom_call.1} parent=11 // pred_check
          %p181 = pneg %p104
        $region18: #{tpu_custom_call.1} parent=11 // pred_check_branch
          %183 = sbr.rel (%p181) target = $region20
        $region19: #{tpu_custom_call.1} parent=11 // pred_region
          _
        $region20: #{tpu_custom_call.1} parent=11 // pred_fallthru
          _
        // Predicated region
        $region21: #{tpu_custom_call.1} parent=11 // pred_check
          %p184 = pneg %p125
        $region22: #{tpu_custom_call.1} parent=11 // pred_check_branch
          %186 = sbr.rel (%p184) target = $region24
        $region23: #{tpu_custom_call.1} parent=11 // pred_region
          _
        $region24: #{tpu_custom_call.1} parent=11 // pred_fallthru
          _
      $region12: #{tpu_custom_call.1} parent=5 // pred_fallthru
        _
      %p187 = scmp.lt.s32.totalorder %s17, 2
      // Predicated region
      $region25: #{tpu_custom_call.1} parent=5 // pred_check
        %p188 = pneg %p187
      $region26: #{tpu_custom_call.1} parent=5 // pred_check_branch
        %190 = sbr.rel (%p188) target = $region28
      $region27: #{tpu_custom_call.1} parent=5 // pred_region
        // Predicated region
        $region29: #{tpu_custom_call.1} parent=27 // pred_check
          %p191 = pneg %p51
        $region30: #{tpu_custom_call.1} parent=27 // pred_check_branch
          %193 = sbr.rel (%p191) target = $region32
        $region31: #{tpu_custom_call.1} parent=27 // pred_region
          %s194 = sand.u32 %s41, 1
          %s195 = scalar_lea.sflag [#allocation3], %s194
          %s196 = sand.u32 %s41, 1
          %s197 = smul.addr %s196, 8
          %s198 = scalar_lea.vmem [#allocation2], %s197
          %s199 = sadd.s32 %s25, %s24
          %s201 = ssub.s32 128, 128
          %202 = vsyncadd %s195, %s201
          %s203 = smul.addr %s199, 128
          %s204 = scalar_lea.hbm %s0, %s203
          %s206 = sshll.u32 %s198, 4
          %s207 = int_to_ptr.vmem [resolvable:$true] %s206
          %209 = dma.hbm_to_vmem [thread:$0]  %s204, 128, %s207, %s195
        $region32: #{tpu_custom_call.1} parent=27 // pred_fallthru
          _
      $region28: #{tpu_custom_call.1} parent=5 // pred_fallthru
        _
      %p210 = scmp.le.s32.totalorder 1, %s17
      %p211 = scmp.lt.s32.totalorder %s17, 3
      %p212 = pnand %p210, %p211
      %p213 = pneg %p212
      // Predicated region
      $region33: #{tpu_custom_call.1} parent=5 // pred_check
        _
      $region34: #{tpu_custom_call.1} parent=5 // pred_check_branch
        %215 = sbr.rel (%p212) target = $region36
      $region35: #{tpu_custom_call.1} parent=5 // pred_region
        %s216 = ssub.s32 %s17, 1
        %s217 = sand.u32 %s44, 1
        %s218 = scalar_lea.sflag [#allocation3], %s217
        %s219 = sand.u32 %s44, 1
        %s220 = smul.addr %s219, 8
        %s221 = scalar_lea.vmem [#allocation2], %s220
        // Predicated region
        $region37: #{tpu_custom_call.1} parent=35 // pred_check
          %p222 = pneg %p57
        $region38: #{tpu_custom_call.1} parent=35 // pred_check_branch
          %224 = sbr.rel (%p222) target = $region40
        $region39: #{tpu_custom_call.1} parent=35 // pred_region
          %225 = dma.done %s218, 128
        $region40: #{tpu_custom_call.1} parent=35 // pred_fallthru
          _
        // Predicated region
        $region41: #{tpu_custom_call.1} parent=35 // pred_check
          %p226 = pneg %p83
        $region42: #{tpu_custom_call.1} parent=35 // pred_check_branch
          %228 = sbr.rel (%p226) target = $region44
        $region43: #{tpu_custom_call.1} parent=35 // pred_region
          %229 = dma.done [#allocation6], 128
        $region44: #{tpu_custom_call.1} parent=35 // pred_fallthru
          _
        %s230 = sand.u32 %s44, 1
        %s231 = scalar_lea.sflag [#allocation3], %s230
        %s232 = sand.u32 %s44, 1
        %s233 = smul.addr %s232, 8
        %s234 = scalar_lea.vmem [#allocation2], %s233
        %p235 = pneg %p57
        %p236 = pneg %p54
        %p237 = pneg %p83
        %p238 = pneg %p80
        %p239 = pneg %p104
        %p240 = pneg %p101
        %p241 = pneg %p125
        %p242 = pneg %p122
        %p243 = pneg %p153
        %p244 = pneg %p150
        %s245 = sand.u32 %s140, 1
        %s246 = scalar_lea.sflag [#allocation4], %s245
        %s247 = sand.u32 %s140, 1
        %s248 = smul.addr %s247, 8
        %s249 = scalar_lea.vmem [#allocation7], %s248
        %s250 = sadd.s32 %s27, %s26
        %s251 = sadd.s32 %s27, %s26
        %v252 = vld [vmem:[%s221] sm:$0xff]
        %v253 = vld [vmem:[#allocation5] sm:$0xff]
        %v254 = vadd.f32 %v252, %v253
        %vm255 = vcmask 261120
        %v256 = vsel %vm255, %v254, 0.0
        %257 = vadd.xlane.f32.xlu0 %v256
        %v258 = vpop.xlane.xlu0 %257
        %v259 = vmul.f32 %v258, 0.03125
        %v260 = vmul.f32 %v254, %v254
        %v261 = vsel %vm255, %v260, 0.0
        %262 = vadd.xlane.f32.xlu0 %v261
        %v263 = vpop.xlane.xlu0 %262
        %v264 = vmul.f32 %v263, 0.03125
        %v265 = vmul.f32 %v259, %v259
        %v266 = vsub.f32 %v264, %v265
        %v267 = vmax.f32 %v266, 0.0
        %v268 = vadd.f32 %v267, 1e-05
        %v269 = vrsqrt.pop %v268
        %v270 = vsub.f32 %v254, %v259
        %v271 = vmul.f32 %v270, %v269
        %v272 = vld [vmem:[%s2] sm:$0x1]
        %v274 = vlaneseq
        %v275 = vshrl.u32 %v274, 7
        %v276 = vsub.s32 0, %v275
        %v277 = vrot.slane %v272, %v276
        %v279 = vmul.f32 %v271, %v277
        %v280 = vld [vmem:[%s3] sm:$0x1]
        %v282 = vlaneseq
        %v283 = vshrl.u32 %v282, 7
        %v284 = vsub.s32 0, %v283
        %v285 = vrot.slane %v280, %v284
        %v287 = vadd.f32 %v279, %v285
        %288 = vst.msk [vmem:[%s249] sm:$0xff] %vm255, %v287
        %s289 = sand.u32 %s140, 1
        %s290 = scalar_lea.sflag [#allocation4], %s289
        %s291 = sand.u32 %s140, 1
        %s292 = smul.addr %s291, 8
        %s293 = scalar_lea.vmem [#allocation7], %s292
        // Predicated region
        $region45: #{tpu_custom_call.1} parent=35 // pred_check
          %p294 = pneg %p150
        $region46: #{tpu_custom_call.1} parent=35 // pred_check_branch
          %296 = sbr.rel (%p294) target = $region48
        $region47: #{tpu_custom_call.1} parent=35 // pred_region
          %s297 = sadd.s32 %s27, %s26
          %s299 = ssub.s32 128, 128
          %300 = vsyncadd %s290, %s299
          %s301 = smul.addr %s297, 128
          %s302 = scalar_lea.hbm %s4, %s301
          %s304 = sshll.u32 %s293, 4
          %s305 = int_to_ptr.vmem [resolvable:$true] %s304
          %307 = dma.vmem_to_hbm [thread:$0]  %s305, 128, %s302, %s290
        $region48: #{tpu_custom_call.1} parent=35 // pred_fallthru
          _
      $region36: #{tpu_custom_call.1} parent=5 // pred_fallthru
        _
      %p308 = scmp.le.s32.totalorder 2, %s17
      // Predicated region
      $region49: #{tpu_custom_call.1} parent=5 // pred_check
        %p309 = pneg %p308
      $region50: #{tpu_custom_call.1} parent=5 // pred_check_branch
        %311 = sbr.rel (%p309) target = $region52
      $region51: #{tpu_custom_call.1} parent=5 // pred_region
        %s312 = ssub.s32 %s17, 2
        // Predicated region
        $region53: #{tpu_custom_call.1} parent=51 // pred_check
          %p313 = pneg %p156
        $region54: #{tpu_custom_call.1} parent=51 // pred_check_branch
          %315 = sbr.rel (%p313) target = $region56
        $region55: #{tpu_custom_call.1} parent=51 // pred_region
          %s316 = sand.u32 %s141, 1
          %s317 = scalar_lea.sflag [#allocation4], %s316
          %s318 = sand.u32 %s141, 1
          %s319 = smul.addr %s318, 8
          %s320 = scalar_lea.vmem [#allocation7], %s319
          %321 = dma.done %s317, 128
        $region56: #{tpu_custom_call.1} parent=51 // pred_fallthru
          _
      $region52: #{tpu_custom_call.1} parent=5 // pred_fallthru
        _
    $region6: #{tpu_custom_call.1} parent=1 // loop_footer
      %s21 = sadd.s32 1, %s17
    $region7: #{tpu_custom_call.1} parent=1 // loop_footer_branch
      %16 = sbr.rel target = $region3
    $region8: #{tpu_custom_call.1} parent=1 // loop_exit
      _
    %322 = vsyncpa [#allocation3], 1
    %s323 = scalar_lea.sflag [#allocation3], 1
    %324 = vsyncpa %s323, 1
    %325 = vsyncpa [#allocation6], 1
    %326 = vsyncpa [#allocation4], 1
    %s327 = scalar_lea.sflag [#allocation4], 1
    %328 = vsyncpa %s327, 1

</llo_original>
